<compile_context>
chip_gen: v5e
topology: v5e:2x2
jax: 0.10.0
libtpu: 0.0.40
codegen_flags: <defaults>
</compile_context>

<pallas_src>
import math

import jax
import jax.numpy as jnp
from jax.experimental import pallas as pl
from jax.experimental.pallas import tpu as pltpu


# ----------------------------------------------------------------------------
# Kernels
# ----------------------------------------------------------------------------
def linear_kernel(x_ref, w_ref, b_ref, o_ref):
    # x_ref: (tm, K), w_ref: (K, N) [already transposed in wrapper], b_ref: (1, N)
    acc = jnp.dot(x_ref[...], w_ref[...], preferred_element_type=jnp.float32)
    o_ref[...] = (acc + b_ref[...]).astype(o_ref.dtype)


def attention_kernel(q_ref, k_ref, v_ref, o_ref):
    # q/k/v refs: (tb, L, Dh) — a batch of (batch*head) slices per grid step.
    dh = q_ref.shape[-1]
    scale = 1.0 / math.sqrt(dh)

    q = q_ref[...].astype(jnp.float32)
    k = k_ref[...].astype(jnp.float32)
    v = v_ref[...].astype(jnp.float32)

    # scores (tb, L, L); contraction over Dh without any explicit transpose.
    s = jnp.einsum("bqd,bkd->bqk", q, k, preferred_element_type=jnp.float32) * scale
    m = jnp.max(s, axis=-1, keepdims=True)
    p = jnp.exp(s - m)
    denom = jnp.sum(p, axis=-1, keepdims=True)
    attn = p / denom

    o = q + jnp.einsum("bqk,bkd->bqd", attn, v, preferred_element_type=jnp.float32)
    o_ref[...] = o.astype(o_ref.dtype)


# ----------------------------------------------------------------------------
# Wrappers
# ----------------------------------------------------------------------------
def _pick_row_tile(m, preferred=512):
    """Largest row tile <= preferred that divides m and is sublane-aligned."""
    if m <= preferred:
        return m
    for t in range(preferred, 7, -1):
        if m % t == 0 and t % 8 == 0:
            return t
    return m  # fall back to one full block


def _pick_batch_tile(n, preferred=64):
    if n <= preferred:
        return n
    for t in range(preferred, 0, -1):
        if n % t == 0:
            return t
    return n


def pallas_linear(x, w_t, b):
    """x: (M, K), w_t: (K, N) (already transposed), b: (N,) -> (M, N)."""
    M, K = x.shape
    N = w_t.shape[1]
    b2 = b.reshape(1, N)
    tm = _pick_row_tile(M)

    return pl.pallas_call(
        linear_kernel,
        out_shape=jax.ShapeDtypeStruct((M, N), x.dtype),
        grid_spec=pltpu.PrefetchScalarGridSpec(
            num_scalar_prefetch=0,
            grid=(M // tm,),
            in_specs=[
                pl.BlockSpec((tm, K), lambda i: (i, 0)),
                pl.BlockSpec((K, N), lambda i: (0, 0)),
                pl.BlockSpec((1, N), lambda i: (0, 0)),
            ],
            out_specs=pl.BlockSpec((tm, N), lambda i: (i, 0)),
        ),
        compiler_params=pltpu.CompilerParams(
            dimension_semantics=("parallel",)
        ),
    )(x, w_t, b2)


def pallas_attention(q, k, v):
    """q/k/v: (BH, L, Dh) -> (BH, L, Dh), per-slice softmax attention + residual."""
    BH, L, Dh = q.shape
    tb = _pick_batch_tile(BH)

    return pl.pallas_call(
        attention_kernel,
        out_shape=jax.ShapeDtypeStruct((BH, L, Dh), q.dtype),
        grid_spec=pltpu.PrefetchScalarGridSpec(
            num_scalar_prefetch=0,
            grid=(BH // tb,),
            in_specs=[
                pl.BlockSpec((tb, L, Dh), lambda i: (i, 0, 0)),
                pl.BlockSpec((tb, L, Dh), lambda i: (i, 0, 0)),
                pl.BlockSpec((tb, L, Dh), lambda i: (i, 0, 0)),
            ],
            out_specs=pl.BlockSpec((tb, L, Dh), lambda i: (i, 0, 0)),
        ),
        compiler_params=pltpu.CompilerParams(
            dimension_semantics=("parallel",)
        ),
    )(q, k, v)


def sab_forward(x, params, number_heads):
    """SAB forward: x (B, L, in_dim) -> (B, L, out_dim). use_ln=False path."""
    Wq, bq, Wk, bk, Wv, bv, Wo, bo = params  # torch.nn.Linear layout: W (out, in)
    B, L, Din = x.shape
    Vdim = Wq.shape[0]
    Dh = Vdim // number_heads
    BH = B * number_heads

    # --- fused QKV projection (single streaming matmul over flattened rows) ---
    x2 = x.reshape(B * L, Din)
    w_qkv_t = jnp.concatenate([Wq, Wk, Wv], axis=0).T        # (Din, 3*Vdim)
    b_qkv = jnp.concatenate([bq, bk, bv], axis=0)            # (3*Vdim,)
    qkv = pallas_linear(x2, w_qkv_t, b_qkv)                  # (B*L, 3*Vdim)

    q = qkv[:, :Vdim]
    k = qkv[:, Vdim:2 * Vdim]
    v = qkv[:, 2 * Vdim:]

    # --- head split: (B*L, Vdim) -> (B*heads, L, Dh) ---
    def split_heads(t):
        t = t.reshape(B, L, number_heads, Dh)
        return t.transpose(0, 2, 1, 3).reshape(BH, L, Dh)

    qh, kh, vh = split_heads(q), split_heads(k), split_heads(v)

    # --- attention core (softmax(QK^T/sqrt(Dh)) V + Q residual) ---
    oh = pallas_attention(qh, kh, vh)                        # (BH, L, Dh)

    # --- merge heads and output projection ---
    o = oh.reshape(B, number_heads, L, Dh).transpose(0, 2, 1, 3).reshape(B * L, Vdim)
    out = pallas_linear(o, Wo.T, bo)                         # (B*L, Vdim)
    return out.reshape(B, L, Vdim)


# ----------------------------------------------------------------------------
# Pure-JAX reference mirroring the torch code (split/cat order included)
# ----------------------------------------------------------------------------
def sab_reference(x, params, number_heads):
    Wq, bq, Wk, bk, Wv, bv, Wo, bo = params
    B, L, Din = x.shape
    Vdim = Wq.shape[0]
    Dh = Vdim // number_heads
    hp = jax.lax.Precision.HIGHEST

    Q = jnp.einsum("bld,vd->blv", x, Wq, precision=hp) + bq
    K = jnp.einsum("bld,vd->blv", x, Wk, precision=hp) + bk
    V = jnp.einsum("bld,vd->blv", x, Wv, precision=hp) + bv

    def split(t):  # torch: cat(t.split(Dh, dim=2), dim=0) -> (heads*B, L, Dh)
        return jnp.concatenate(jnp.split(t, number_heads, axis=2), axis=0)

    Qs, Ks, Vs = split(Q), split(K), split(V)
    attn = jax.nn.softmax(
        jnp.einsum("bqd,bkd->bqk", Qs, Ks, precision=hp) / math.sqrt(Dh), axis=-1
    )
    O = Qs + jnp.einsum("bqk,bkd->bqd", attn, Vs, precision=hp)
    O = jnp.concatenate(jnp.split(O, number_heads, axis=0), axis=2)  # (B, L, Vdim)
    O = jnp.einsum("blv,ov->blo", O, Wo, precision=hp) + bo
    return O


# ----------------------------------------------------------------------------
# Demo
# ----------------------------------------------------------------------------
if __name__ == "__main__":
    B = 2            # batch
    L = 8            # set size (sequence length)
    IN_DIM = 32      # Qdim == Kdim
    OUT_DIM = 32     # Vdim
    HEADS = 4        # number_heads (Dh = 8)

    key = jax.random.PRNGKey(0)
    keys = jax.random.split(key, 9)

    x = jax.random.normal(keys[0], (B, L, IN_DIM), dtype=jnp.float32)

    def linear_params(kw, kb, out_dim, in_dim):
        bound = 1.0 / math.sqrt(in_dim)
        w = jax.random.uniform(kw, (out_dim, in_dim), jnp.float32, -bound, bound)
        b = jax.random.uniform(kb, (out_dim,), jnp.float32, -bound, bound)
        return w, b

    Wq, bq = linear_params(keys[1], keys[2], OUT_DIM, IN_DIM)
    Wk, bk = linear_params(keys[3], keys[4], OUT_DIM, IN_DIM)
    Wv, bv = linear_params(keys[5], keys[6], OUT_DIM, IN_DIM)
    Wo, bo = linear_params(keys[7], keys[8], OUT_DIM, OUT_DIM)
    params = (Wq, bq, Wk, bk, Wv, bv, Wo, bo)

    out = sab_forward(x, params, HEADS)
    out = jax.block_until_ready(out)

    ref = sab_reference(x, params, HEADS)
    assert out.shape == (B, L, OUT_DIM)
    assert jnp.allclose(out, ref, atol=1e-3, rtol=1e-3), (
        float(jnp.max(jnp.abs(out - ref)))
    )

    print("KERNEL_OK")
</pallas_src>

<mosaic_0001>
module attributes {stable_mosaic.version = 11 : i64} {
  func.func @linear_kernel(%arg0: i32, %arg1: memref<16x32xf32, #tpu.memory_space<vmem>>, %arg2: memref<32x96xf32, #tpu.memory_space<vmem>>, %arg3: memref<1x96xf32, #tpu.memory_space<vmem>>, %arg4: memref<16x96xf32, #tpu.memory_space<vmem>>) attributes {dimension_semantics = [#tpu.dimension_semantics<parallel>], iteration_bounds = array<i64: 1>, scalar_prefetch = 0 : i64, scratch_operands = 0 : i64, tpu.core_type = #tpu.core_type<tc>, window_params = [{transform_indices = @transform_0, window_bounds = array<i64: 16, 32>}, {pipeline_mode = #tpu.pipeline_mode<synchronous>, transform_indices = @transform_1, window_bounds = array<i64: 32, 96>}, {pipeline_mode = #tpu.pipeline_mode<synchronous>, transform_indices = @transform_2, window_bounds = array<i64: 1, 96>}, {transform_indices = @transform_3, window_bounds = array<i64: 16, 96>}]} {
    %c0 = arith.constant 0 : index
    %c0_0 = arith.constant 0 : index
    %0 = vector.load %arg1[%c0, %c0_0] : memref<16x32xf32, #tpu.memory_space<vmem>>, vector<16x32xf32>
    %c0_1 = arith.constant 0 : index
    %c0_2 = arith.constant 0 : index
    %1 = vector.load %arg2[%c0_1, %c0_2] : memref<32x96xf32, #tpu.memory_space<vmem>>, vector<32x96xf32>
    %cst = arith.constant dense<0.000000e+00> : vector<16x96xf32>
    %2 = tpu.matmul %0, %1, %cst {dimension_numbers = #tpu.dot_dimension_numbers<[1], [0], [0], [1], [0, 0, 1, 1], [], []>} : vector<16x32xf32>, vector<32x96xf32>, vector<16x96xf32> -> vector<16x96xf32>
    %c0_3 = arith.constant 0 : index
    %c0_4 = arith.constant 0 : index
    %3 = vector.load %arg3[%c0_3, %c0_4] : memref<1x96xf32, #tpu.memory_space<vmem>>, vector<1x96xf32>
    %4 = vector.broadcast %3 : vector<1x96xf32> to vector<16x96xf32>
    %5 = arith.addf %2, %4 : vector<16x96xf32>
    %c0_5 = arith.constant 0 : index
    %c0_6 = arith.constant 0 : index
    %6 = vector.load %arg4[%c0_5, %c0_6] : memref<16x96xf32, #tpu.memory_space<vmem>>, vector<16x96xf32>
    tpu.vector_store %arg4[%c0_5, %c0_6], %5 {strides = array<i32>} : memref<16x96xf32, #tpu.memory_space<vmem>>, vector<16x96xf32>,
    return
  }
  func.func @transform_0(%arg0: i32) -> (i32, i32) {
    %c0_i32 = arith.constant 0 : i32
    %c0_i32_0 = arith.constant 0 : i32
    return %arg0, %c0_i32 : i32, i32
  }
  func.func @transform_1(%arg0: i32) -> (i32, i32) {
    %c0_i32 = arith.constant 0 : i32
    %c0_i32_0 = arith.constant 0 : i32
    %c0_i32_1 = arith.constant 0 : i32
    return %c0_i32, %c0_i32_0 : i32, i32
  }
  func.func @transform_2(%arg0: i32) -> (i32, i32) {
    %c0_i32 = arith.constant 0 : i32
    %c0_i32_0 = arith.constant 0 : i32
    %c0_i32_1 = arith.constant 0 : i32
    return %c0_i32, %c0_i32_0 : i32, i32
  }
  func.func @transform_3(%arg0: i32) -> (i32, i32) {
    %c0_i32 = arith.constant 0 : i32
    %c0_i32_0 = arith.constant 0 : i32
    return %arg0, %c0_i32 : i32, i32
  }
}

</mosaic_0001>

<llo_original>
// kernel: tpu_custom_call.1
$region0: #{tpu_custom_call.1}
  #allocation0 [shape = 'u32[]', space=smem, size = 0x4, offset = 0x4, fixed_abs, tag = 'smem constant byte address 0x4 - core index']
  #allocation1 [shape = 'u32[72,128]{1,0:T(1,128)}', space=vmem, size = 0x9000, scoped, tag = 'internal scratch']
  %s0 = inlined_call_operand.hbm [shape: f32[16,32], index: 0, kind: input, shape index: {}]
  %s1 = inlined_call_operand.hbm [shape: f32[32,96], index: 1, kind: input, shape index: {}]
  %s2 = inlined_call_operand.vmem [shape: f32[1,96], index: 2, kind: input, shape index: {}]
  %s3 = inlined_call_operand.hbm [shape: f32[16,96], index: 3, kind: output, shape index: {}]
  %s4 = sld [smem:[#allocation0]]
  $region30: #{tpu_custom_call.1} parent=0
    _
  %s6 = ssub.s32 1, %s4
  %s7 = scalar_select 0, %s6, %s4
  $region1: #{tpu_custom_call.1} parent=0
    #allocation2 [shape = 'u8[8192]{0}', space=vmem, size = 0x2000, scoped, tag = 'input window, operand 0, single buffered']
    #allocation3 [shape = 's32[1]{0}', space=sflag, size = 0x4, scoped, tag = 'scoped memory for tpu_custom_call.1']
    #allocation4 [shape = 's32[1]{0}', space=sflag, size = 0x4, scoped, tag = 'scoped memory for tpu_custom_call.1']
    #allocation5 [shape = 'u8[16384]{0}', space=vmem, size = 0x4000, scoped, tag = 'input window, operand 1, single buffered']
    #allocation6 [shape = 's32[1]{0}', space=sflag, size = 0x4, scoped, tag = 'scoped memory for tpu_custom_call.1']
    #allocation7 [shape = 'u8[8192]{0}', space=vmem, size = 0x2000, scoped, tag = 'output window, operand 0, single buffered']
    %8 = vsyncpa [#allocation3], 0
    %9 = vsyncpa [#allocation6], 0
    %10 = vsyncpa [#allocation4], 0
    // Predicated region
    $region2: #{tpu_custom_call.1} parent=1 // pred_check
      _
    $region3: #{tpu_custom_call.1} parent=1 // pred_check_branch
      %12 = sbr.rel (0) target = $region5
    $region4: #{tpu_custom_call.1} parent=1 // pred_region
      %14 = vsyncadd [#allocation3], 0
      %s15 = sshll.u32 %s0, 4
      %s16 = int_to_ptr.hbm [resolvable:$true] %s15
      %s17 = sshll.u32 [#allocation2], 4
      %s18 = int_to_ptr.vmem [resolvable:$true] %s17
      %23 = dma.hbm_to_vmem [thread:$0]  %s16, 256, %s18, [#allocation3], 128, 128, 8
    $region5: #{tpu_custom_call.1} parent=1 // pred_fallthru
      _
    // Predicated region
    $region6: #{tpu_custom_call.1} parent=1 // pred_check
      _
    $region7: #{tpu_custom_call.1} parent=1 // pred_check_branch
      %25 = sbr.rel (0) target = $region9
    $region8: #{tpu_custom_call.1} parent=1 // pred_region
      %27 = vsyncadd [#allocation6], 0
      %s28 = sshll.u32 %s1, 4
      %s29 = int_to_ptr.hbm [resolvable:$true] %s28
      %s30 = sshll.u32 [#allocation5], 4
      %s31 = int_to_ptr.vmem [resolvable:$true] %s30
      %36 = dma.hbm_to_vmem [thread:$0]  %s29, 512, %s31, [#allocation6], 128, 128, 8
    $region9: #{tpu_custom_call.1} parent=1 // pred_fallthru
      _
    // Predicated region
    $region10: #{tpu_custom_call.1} parent=1 // pred_check
      _
    $region11: #{tpu_custom_call.1} parent=1 // pred_check_branch
      %38 = sbr.rel (0) target = $region13
    $region12: #{tpu_custom_call.1} parent=1 // pred_region
      _
    $region13: #{tpu_custom_call.1} parent=1 // pred_fallthru
      _
    // Predicated region
    $region14: #{tpu_custom_call.1} parent=1 // pred_check
      _
    $region15: #{tpu_custom_call.1} parent=1 // pred_check_branch
      %40 = sbr.rel (0) target = $region17
    $region16: #{tpu_custom_call.1} parent=1 // pred_region
      %42 = dma.done [#allocation3], 256
    $region17: #{tpu_custom_call.1} parent=1 // pred_fallthru
      _
    // Predicated region
    $region18: #{tpu_custom_call.1} parent=1 // pred_check
      _
    $region19: #{tpu_custom_call.1} parent=1 // pred_check_branch
      %44 = sbr.rel (0) target = $region21
    $region20: #{tpu_custom_call.1} parent=1 // pred_region
      %46 = dma.done [#allocation6], 512
    $region21: #{tpu_custom_call.1} parent=1 // pred_fallthru
      _
    %v47 = vld [vmem:[#allocation2] sm:$0xff]
    %v48 = vld [vmem:[#allocation2 + $0x8] sm:$0xff]
    %v49 = vld [vmem:[#allocation5] sm:$0xff]
    %v50 = vld [vmem:[#allocation5 + $0x8] sm:$0xff]
    %v51 = vld [vmem:[#allocation5 + $0x10] sm:$0xff]
    %v52 = vld [vmem:[#allocation5 + $0x18] sm:$0xff]
    %v53 = vld [vmem:[%s2] sm:$0x1]
    %v55 = vperm.slane %v53, 0
    %vm57 = vcmask 261120
    %v59 = vsel %vm57, %v47, 0
    %v62 = vsel %vm57, %v48, 0
    %64 = vmatpush.msra.mxu0 0.0
    %65 = vmatpush.msra.mxu0 0.0
    %66 = vmatpush.msra.mxu0 0.0
    %67 = vmatpush.msra.mxu0 0.0
    %68 = vmatpush.msra.mxu0 0.0
    %69 = vmatpush.msra.mxu0 0.0
    %70 = vmatpush.msra.mxu0 0.0
    %71 = vmatpush.msra.mxu0 0.0
    %72 = vmatpush.msra.mxu0 0.0
    %73 = vmatpush.msra.mxu0 0.0
    %74 = vmatpush.msra.mxu0 0.0
    %75 = vmatpush.msra.mxu0 0.0
    %76 = vmatpush.msra.mxu0 %v52
    %77 = vmatpush.msra.mxu0 %v51
    %78 = vmatpush.msra.mxu0 %v50
    %79 = vmatpush.msra.mxu0 %v49
    %80 = vmatmul.f32.gmra.mxu0 %v59
    %v81 = vpop.f32.mrf.mxu0
    %v82 = vadd.f32 %v55, %v81
    %83 = vmatmul.f32.gmra.mxu0 %v62
    %v84 = vpop.f32.mrf.mxu0
    %v85 = vadd.f32 %v55, %v84
    %86 = vdwg.mxu0
    %vm87 = vcmask 785408
    %88 = vst.msk [vmem:[#allocation7] sm:$0xff] %vm87, %v82
    %89 = vst.msk [vmem:[#allocation7 + $0x8] sm:$0xff] %vm87, %v85
    // Predicated region
    $region22: #{tpu_custom_call.1} parent=1 // pred_check
      _
    $region23: #{tpu_custom_call.1} parent=1 // pred_check_branch
      %91 = sbr.rel (0) target = $region25
    $region24: #{tpu_custom_call.1} parent=1 // pred_region
      %93 = vsyncadd [#allocation4], 0
      %s94 = sshll.u32 [#allocation7], 4
      %s95 = int_to_ptr.vmem [resolvable:$true] %s94
      %s96 = sshll.u32 %s3, 4
      %s97 = int_to_ptr.hbm [resolvable:$true] %s96
      %102 = dma.vmem_to_hbm [thread:$0]  %s95, 256, %s97, [#allocation4], 128, 128, 8
    $region25: #{tpu_custom_call.1} parent=1 // pred_fallthru
      _
    // Predicated region
    $region26: #{tpu_custom_call.1} parent=1 // pred_check
      _
    $region27: #{tpu_custom_call.1} parent=1 // pred_check_branch
      %104 = sbr.rel (0) target = $region29
    $region28: #{tpu_custom_call.1} parent=1 // pred_region
      %106 = dma.done [#allocation4], 256
    $region29: #{tpu_custom_call.1} parent=1 // pred_fallthru
      _
    %107 = vsyncpa [#allocation3], 1
    %108 = vsyncpa [#allocation6], 1
    %109 = vsyncpa [#allocation4], 1

</llo_original>
